<compile_context>
chip_gen: v6e
topology: v6e:2x2x1
jax: 0.10.0
libtpu: 0.0.40
codegen_flags: <defaults>
</compile_context>

<pallas_src>
import math

import jax
import jax.numpy as jnp
from jax.experimental import pallas as pl
from jax.experimental.pallas import tpu as pltpu


# ----------------------------------------------------------------------------
# Pallas kernel: one grid step processes a (batch_tile * seq, .) row slab.
# ----------------------------------------------------------------------------
def _sel_embedding_kernel(x_ref, pos_ref, w1_ref, b1_ref, w2_ref, b2_ref, o_ref):
    x = x_ref[...]                                                 # (M, D)
    h = jnp.dot(x, w1_ref[...],
                preferred_element_type=jnp.float32) + b1_ref[...]  # (M, E)
    y = jnp.dot(h, w2_ref[...],
                preferred_element_type=jnp.float32) + b2_ref[...]  # (M, E)
    o_ref[...] = (y + pos_ref[...]).astype(o_ref.dtype)


def _pick_batch_tile(batch, seq, target_rows=512):
    """Largest batch divisor whose row-slab (bb*seq) is 8-aligned and <= target."""
    candidates = [bb for bb in range(1, batch + 1)
                  if batch % bb == 0 and (bb == batch or (bb * seq) % 8 == 0)]
    fitting = [bb for bb in candidates if bb * seq <= target_rows]
    return max(fitting) if fitting else min(candidates)


def sel_embedding_net(params, vec, pos_table):
    """vec: (B, S, node_dim), pos_table: (S, embed_dim) -> (B, S, embed_dim)."""
    B, S, D = vec.shape
    E = params["w2"].shape[1]

    BB = _pick_batch_tile(B, S)     # batch elements per grid step
    M = BB * S                      # matmul M-dim per step (>= 8-aligned)

    vec_flat = vec.reshape(B * S, D)            # free layout plumbing in XLA
    pos_tile = jnp.tile(pos_table, (BB, 1))     # (M, E): same pattern every tile

    out_flat = pl.pallas_call(
        _sel_embedding_kernel,
        out_shape=jax.ShapeDtypeStruct((B * S, E), vec.dtype),
        grid_spec=pltpu.PrefetchScalarGridSpec(
            num_scalar_prefetch=0,
            grid=(B // BB,),
            in_specs=[
                pl.BlockSpec((M, D), lambda i: (i, 0)),    # input rows (per tile)
                pl.BlockSpec((M, E), lambda i: (0, 0)),    # pos enc (resident)
                pl.BlockSpec((D, E), lambda i: (0, 0)),    # W1      (resident)
                pl.BlockSpec((1, E), lambda i: (0, 0)),    # b1      (resident)
                pl.BlockSpec((E, E), lambda i: (0, 0)),    # W2      (resident)
                pl.BlockSpec((1, E), lambda i: (0, 0)),    # b2      (resident)
            ],
            out_specs=pl.BlockSpec((M, E), lambda i: (i, 0)),
        ),
        compiler_params=pltpu.CompilerParams(
            dimension_semantics=("parallel",)),
    )(vec_flat, pos_tile, params["w1"], params["b1"], params["w2"], params["b2"])

    return out_flat.reshape(B, S, E)


# ----------------------------------------------------------------------------
# Parameters / positional encoding / reference
# ----------------------------------------------------------------------------
def init_sel_embedding_params(key, node_dim, embedding_dim):
    """Matches nn.Linear default init: U(-1/sqrt(fan_in), 1/sqrt(fan_in))."""
    k = jax.random.split(key, 4)
    s1 = 1.0 / math.sqrt(node_dim)
    s2 = 1.0 / math.sqrt(embedding_dim)
    return {
        "w1": jax.random.uniform(k[0], (node_dim, embedding_dim), jnp.float32, -s1, s1),
        "b1": jax.random.uniform(k[1], (1, embedding_dim), jnp.float32, -s1, s1),
        "w2": jax.random.uniform(k[2], (embedding_dim, embedding_dim), jnp.float32, -s2, s2),
        "b2": jax.random.uniform(k[3], (1, embedding_dim), jnp.float32, -s2, s2),
    }


def selposition_encoding_table(seq_len, emb_dim):
    """Standard sinusoid position-encoding table, shape (seq_len, emb_dim)."""
    pos = jnp.arange(seq_len, dtype=jnp.float32)[:, None]
    j = jnp.arange(emb_dim, dtype=jnp.float32)[None, :]
    angle = pos / jnp.power(10000.0, 2.0 * jnp.floor(j / 2.0) / emb_dim)
    even = (jnp.arange(emb_dim) % 2) == 0
    return jnp.where(even[None, :], jnp.sin(angle), jnp.cos(angle)).astype(jnp.float32)


def _reference(params, vec, pos_table):
    """Pure-JAX mirror of the PyTorch forward."""
    h = jnp.matmul(vec, params["w1"]) + params["b1"][0]
    y = jnp.matmul(h, params["w2"]) + params["b2"][0]
    return y + pos_table[None, :, :]


# ----------------------------------------------------------------------------
# Demo / self-check
# ----------------------------------------------------------------------------
if __name__ == "__main__":
    population = 4        # node_dim (input feature width)
    embedding_dim = 128   # lane-dense output (multiple of 128)
    batch, seq = 2, 8

    root = jax.random.PRNGKey(0)
    k_params, k_vec = jax.random.split(root, 2)

    params = init_sel_embedding_params(k_params, population, embedding_dim)
    vec = jax.random.normal(k_vec, (batch, seq, population), jnp.float32)
    pos_table = selposition_encoding_table(seq, embedding_dim)

    out = jax.block_until_ready(sel_embedding_net(params, vec, pos_table))

    ref = _reference(params, vec, pos_table)
    assert out.shape == (batch, seq, embedding_dim)
    assert jnp.allclose(out, ref, atol=1e-5, rtol=1e-5), "mismatch vs reference"

    print("KERNEL_OK")
</pallas_src>

<mosaic_0001>
module attributes {stable_mosaic.version = 11 : i64} {
  func.func @_sel_embedding_kernel(%arg0: i32, %arg1: memref<16x4xf32, #tpu.memory_space<vmem>>, %arg2: memref<16x128xf32, #tpu.memory_space<vmem>>, %arg3: memref<4x128xf32, #tpu.memory_space<vmem>>, %arg4: memref<1x128xf32, #tpu.memory_space<vmem>>, %arg5: memref<128x128xf32, #tpu.memory_space<vmem>>, %arg6: memref<1x128xf32, #tpu.memory_space<vmem>>, %arg7: memref<16x128xf32, #tpu.memory_space<vmem>>) attributes {dimension_semantics = [#tpu.dimension_semantics<parallel>], iteration_bounds = array<i64: 1>, scalar_prefetch = 0 : i64, scratch_operands = 0 : i64, tpu.core_type = #tpu.core_type<tc>, window_params = [{transform_indices = @transform_0, window_bounds = array<i64: 16, 4>}, {pipeline_mode = #tpu.pipeline_mode<synchronous>, transform_indices = @transform_1, window_bounds = array<i64: 16, 128>}, {pipeline_mode = #tpu.pipeline_mode<synchronous>, transform_indices = @transform_2, window_bounds = array<i64: 4, 128>}, {pipeline_mode = #tpu.pipeline_mode<synchronous>, transform_indices = @transform_3, window_bounds = array<i64: 1, 128>}, {pipeline_mode = #tpu.pipeline_mode<synchronous>, transform_indices = @transform_4, window_bounds = array<i64: 128, 128>}, {pipeline_mode = #tpu.pipeline_mode<synchronous>, transform_indices = @transform_5, window_bounds = array<i64: 1, 128>}, {transform_indices = @transform_6, window_bounds = array<i64: 16, 128>}]} {
    %c0 = arith.constant 0 : index
    %c0_0 = arith.constant 0 : index
    %0 = vector.load %arg1[%c0, %c0_0] : memref<16x4xf32, #tpu.memory_space<vmem>>, vector<16x4xf32>
    %c0_1 = arith.constant 0 : index
    %c0_2 = arith.constant 0 : index
    %1 = vector.load %arg3[%c0_1, %c0_2] : memref<4x128xf32, #tpu.memory_space<vmem>>, vector<4x128xf32>
    %cst = arith.constant dense<0.000000e+00> : vector<16x128xf32>
    %2 = tpu.matmul %0, %1, %cst {dimension_numbers = #tpu.dot_dimension_numbers<[1], [0], [0], [1], [0, 0, 1, 1], [], []>} : vector<16x4xf32>, vector<4x128xf32>, vector<16x128xf32> -> vector<16x128xf32>
    %c0_3 = arith.constant 0 : index
    %c0_4 = arith.constant 0 : index
    %3 = vector.load %arg4[%c0_3, %c0_4] : memref<1x128xf32, #tpu.memory_space<vmem>>, vector<1x128xf32>
    %4 = vector.broadcast %3 : vector<1x128xf32> to vector<16x128xf32>
    %5 = arith.addf %2, %4 : vector<16x128xf32>
    %c0_5 = arith.constant 0 : index
    %c0_6 = arith.constant 0 : index
    %6 = vector.load %arg5[%c0_5, %c0_6] : memref<128x128xf32, #tpu.memory_space<vmem>>, vector<128x128xf32>
    %cst_7 = arith.constant dense<0.000000e+00> : vector<16x128xf32>
    %7 = tpu.matmul %5, %6, %cst_7 {dimension_numbers = #tpu.dot_dimension_numbers<[1], [0], [0], [1], [0, 0, 1, 1], [], []>} : vector<16x128xf32>, vector<128x128xf32>, vector<16x128xf32> -> vector<16x128xf32>
    %c0_8 = arith.constant 0 : index
    %c0_9 = arith.constant 0 : index
    %8 = vector.load %arg6[%c0_8, %c0_9] : memref<1x128xf32, #tpu.memory_space<vmem>>, vector<1x128xf32>
    %9 = vector.broadcast %8 : vector<1x128xf32> to vector<16x128xf32>
    %10 = arith.addf %7, %9 : vector<16x128xf32>
    %c0_10 = arith.constant 0 : index
    %c0_11 = arith.constant 0 : index
    %11 = vector.load %arg2[%c0_10, %c0_11] : memref<16x128xf32, #tpu.memory_space<vmem>>, vector<16x128xf32>
    %12 = arith.addf %10, %11 : vector<16x128xf32>
    %c0_12 = arith.constant 0 : index
    %c0_13 = arith.constant 0 : index
    %13 = vector.load %arg7[%c0_12, %c0_13] : memref<16x128xf32, #tpu.memory_space<vmem>>, vector<16x128xf32>
    tpu.vector_store %arg7[%c0_12, %c0_13], %12 {strides = array<i32>} : memref<16x128xf32, #tpu.memory_space<vmem>>, vector<16x128xf32>,
    return
  }
  func.func @transform_0(%arg0: i32) -> (i32, i32) {
    %c0_i32 = arith.constant 0 : i32
    %c0_i32_0 = arith.constant 0 : i32
    return %arg0, %c0_i32 : i32, i32
  }
  func.func @transform_1(%arg0: i32) -> (i32, i32) {
    %c0_i32 = arith.constant 0 : i32
    %c0_i32_0 = arith.constant 0 : i32
    %c0_i32_1 = arith.constant 0 : i32
    return %c0_i32, %c0_i32_0 : i32, i32
  }
  func.func @transform_2(%arg0: i32) -> (i32, i32) {
    %c0_i32 = arith.constant 0 : i32
    %c0_i32_0 = arith.constant 0 : i32
    %c0_i32_1 = arith.constant 0 : i32
    return %c0_i32, %c0_i32_0 : i32, i32
  }
  func.func @transform_3(%arg0: i32) -> (i32, i32) {
    %c0_i32 = arith.constant 0 : i32
    %c0_i32_0 = arith.constant 0 : i32
    %c0_i32_1 = arith.constant 0 : i32
    return %c0_i32, %c0_i32_0 : i32, i32
  }
  func.func @transform_4(%arg0: i32) -> (i32, i32) {
    %c0_i32 = arith.constant 0 : i32
    %c0_i32_0 = arith.constant 0 : i32
    %c0_i32_1 = arith.constant 0 : i32
    return %c0_i32, %c0_i32_0 : i32, i32
  }
  func.func @transform_5(%arg0: i32) -> (i32, i32) {
    %c0_i32 = arith.constant 0 : i32
    %c0_i32_0 = arith.constant 0 : i32
    %c0_i32_1 = arith.constant 0 : i32
    return %c0_i32, %c0_i32_0 : i32, i32
  }
  func.func @transform_6(%arg0: i32) -> (i32, i32) {
    %c0_i32 = arith.constant 0 : i32
    %c0_i32_0 = arith.constant 0 : i32
    return %arg0, %c0_i32 : i32, i32
  }
}

</mosaic_0001>

<llo_original>
// kernel: tpu_custom_call.1
$region0: #{tpu_custom_call.1}
  #allocation0 [shape = 'u32[]', space=smem, size = 0x4, offset = 0x4, fixed_abs, tag = 'smem constant byte address 0x4 - core index']
  #allocation1 [shape = 'u32[144,128]{1,0:T(1,128)}', space=vmem, size = 0x12000, scoped, tag = 'internal scratch']
  %s0 = inlined_call_operand.vmem [shape: f32[16,4], index: 0, kind: input, shape index: {}]
  %s1 = inlined_call_operand.vmem [shape: f32[16,128], index: 1, kind: input, shape index: {}]
  %s2 = inlined_call_operand.vmem [shape: f32[4,128], index: 2, kind: input, shape index: {}]
  %s3 = inlined_call_operand.vmem [shape: f32[1,128], index: 3, kind: input, shape index: {}]
  %s4 = inlined_call_operand.hbm [shape: f32[128,128], index: 4, kind: input, shape index: {}]
  %s5 = inlined_call_operand.vmem [shape: f32[1,128], index: 5, kind: input, shape index: {}]
  %s6 = inlined_call_operand.hbm [shape: f32[16,128], index: 6, kind: output, shape index: {}]
  %s7 = sld [smem:[#allocation0]]
  $region38: #{tpu_custom_call.1} parent=0
    _
  %s9 = ssub.s32 1, %s7
  %s10 = scalar_select 0, %s9, %s7
  $region1: #{tpu_custom_call.1} parent=0
    #allocation2 [shape = 'u8[65536]{0}', space=vmem, size = 0x10000, scoped, tag = 'input window, operand 4, single buffered']
    #allocation3 [shape = 's32[1]{0}', space=sflag, size = 0x4, scoped, tag = 'scoped memory for tpu_custom_call.1']
    #allocation4 [shape = 's32[1]{0}', space=sflag, size = 0x4, scoped, tag = 'scoped memory for tpu_custom_call.1']
    #allocation5 [shape = 'u8[8192]{0}', space=vmem, size = 0x2000, scoped, tag = 'output window, operand 0, single buffered']
    %11 = vsyncpa [#allocation3], 0
    %12 = vsyncpa [#allocation4], 0
    // Predicated region
    $region2: #{tpu_custom_call.1} parent=1 // pred_check
      _
    $region3: #{tpu_custom_call.1} parent=1 // pred_check_branch
      %14 = sbr.rel (0) target = $region5
    $region4: #{tpu_custom_call.1} parent=1 // pred_region
      _
    $region5: #{tpu_custom_call.1} parent=1 // pred_fallthru
      _
    // Predicated region
    $region6: #{tpu_custom_call.1} parent=1 // pred_check
      _
    $region7: #{tpu_custom_call.1} parent=1 // pred_check_branch
      %16 = sbr.rel (0) target = $region9
    $region8: #{tpu_custom_call.1} parent=1 // pred_region
      _
    $region9: #{tpu_custom_call.1} parent=1 // pred_fallthru
      _
    // Predicated region
    $region10: #{tpu_custom_call.1} parent=1 // pred_check
      _
    $region11: #{tpu_custom_call.1} parent=1 // pred_check_branch
      %18 = sbr.rel (0) target = $region13
    $region12: #{tpu_custom_call.1} parent=1 // pred_region
      _
    $region13: #{tpu_custom_call.1} parent=1 // pred_fallthru
      _
    // Predicated region
    $region14: #{tpu_custom_call.1} parent=1 // pred_check
      _
    $region15: #{tpu_custom_call.1} parent=1 // pred_check_branch
      %20 = sbr.rel (0) target = $region17
    $region16: #{tpu_custom_call.1} parent=1 // pred_region
      _
    $region17: #{tpu_custom_call.1} parent=1 // pred_fallthru
      _
    // Predicated region
    $region18: #{tpu_custom_call.1} parent=1 // pred_check
      _
    $region19: #{tpu_custom_call.1} parent=1 // pred_check_branch
      %22 = sbr.rel (0) target = $region21
    $region20: #{tpu_custom_call.1} parent=1 // pred_region
      %s24 = ssub.s32 2048, 2048
      %25 = vsyncadd [#allocation3], %s24
      %s26 = sshll.u32 [#allocation2], 4
      %s27 = int_to_ptr.vmem [resolvable:$true] %s26
      %32 = dma.hbm_to_vmem [thread:$0]  %s4, 2048, %s27, [#allocation3], 128, 128, 8
    $region21: #{tpu_custom_call.1} parent=1 // pred_fallthru
      _
    // Predicated region
    $region22: #{tpu_custom_call.1} parent=1 // pred_check
      _
    $region23: #{tpu_custom_call.1} parent=1 // pred_check_branch
      %34 = sbr.rel (0) target = $region25
    $region24: #{tpu_custom_call.1} parent=1 // pred_region
      _
    $region25: #{tpu_custom_call.1} parent=1 // pred_fallthru
      _
    // Predicated region
    $region26: #{tpu_custom_call.1} parent=1 // pred_check
      _
    $region27: #{tpu_custom_call.1} parent=1 // pred_check_branch
      %36 = sbr.rel (0) target = $region29
    $region28: #{tpu_custom_call.1} parent=1 // pred_region
      %37 = dma.done [#allocation3], 2048
    $region29: #{tpu_custom_call.1} parent=1 // pred_fallthru
      _
    %v38 = vld [vmem:[%s0] sm:$0xff]
    %v39 = vld [vmem:[%s0 + $0x8] sm:$0xff]
    %v40 = vld [vmem:[%s2] sm:$0xf]
    %v41 = vld [vmem:[%s3] sm:$0x1]
    %v43 = vlaneseq
    %v44 = vshrl.u32 %v43, 7
    %v45 = vsub.s32 0, %v44
    %v46 = vrot.slane %v41, %v45
    %vm48 = vcmask 31744
    %v50 = vsel %vm48, %v38, 0
    %v53 = vsel %vm48, %v39, 0
    %vm55 = vcmask 1043456
    %v57 = vsel %vm55, %v40, 0
    %59 = vmatprep.subr.mxu0 0.0
    %60 = vmatpush1.msra.mxu0 0.0
    %61 = vmatprep.subr.mxu0 0.0
    %62 = vmatpush1.msra.mxu0 0.0
    %63 = vmatprep.subr.mxu0 0.0
    %64 = vmatpush1.msra.mxu0 0.0
    %65 = vmatprep.subr.mxu0 0.0
    %66 = vmatpush1.msra.mxu0 0.0
    %67 = vmatprep.subr.mxu0 0.0
    %68 = vmatpush1.msra.mxu0 0.0
    %69 = vmatprep.subr.mxu0 0.0
    %70 = vmatpush1.msra.mxu0 0.0
    %71 = vmatprep.subr.mxu0 0.0
    %72 = vmatpush1.msra.mxu0 0.0
    %73 = vmatprep.subr.mxu0 0.0
    %74 = vmatpush1.msra.mxu0 0.0
    %75 = vmatprep.subr.mxu0 0.0
    %76 = vmatpush1.msra.mxu0 0.0
    %77 = vmatprep.subr.mxu0 0.0
    %78 = vmatpush1.msra.mxu0 0.0
    %79 = vmatprep.subr.mxu0 0.0
    %80 = vmatpush1.msra.mxu0 0.0
    %81 = vmatprep.subr.mxu0 0.0
    %82 = vmatpush1.msra.mxu0 0.0
    %83 = vmatprep.subr.mxu0 0.0
    %84 = vmatpush1.msra.mxu0 0.0
    %85 = vmatprep.subr.mxu0 0.0
    %86 = vmatpush1.msra.mxu0 0.0
    %87 = vmatprep.subr.mxu0 0.0
    %88 = vmatpush1.msra.mxu0 0.0
    %89 = vmatprep.subr.mxu0 0.0
    %90 = vmatpush1.msra.mxu0 %v57
    %91 = vmatprep.subr.mxu0 0.0
    %92 = vmatpush2.msra.mxu0 0.0
    %93 = vmatprep.subr.mxu0 0.0
    %94 = vmatpush2.msra.mxu0 0.0
    %95 = vmatprep.subr.mxu0 0.0
    %96 = vmatpush2.msra.mxu0 0.0
    %97 = vmatprep.subr.mxu0 0.0
    %98 = vmatpush2.msra.mxu0 0.0
    %99 = vmatprep.subr.mxu0 0.0
    %100 = vmatpush2.msra.mxu0 0.0
    %101 = vmatprep.subr.mxu0 0.0
    %102 = vmatpush2.msra.mxu0 0.0
    %103 = vmatprep.subr.mxu0 0.0
    %104 = vmatpush2.msra.mxu0 0.0
    %105 = vmatprep.subr.mxu0 0.0
    %106 = vmatpush2.msra.mxu0 0.0
    %107 = vmatprep.subr.mxu0 0.0
    %108 = vmatpush2.msra.mxu0 0.0
    %109 = vmatprep.subr.mxu0 0.0
    %110 = vmatpush2.msra.mxu0 0.0
    %111 = vmatprep.subr.mxu0 0.0
    %112 = vmatpush2.msra.mxu0 0.0
    %113 = vmatprep.subr.mxu0 0.0
    %114 = vmatpush2.msra.mxu0 0.0
    %115 = vmatprep.subr.mxu0 0.0
    %116 = vmatpush2.msra.mxu0 0.0
    %117 = vmatprep.subr.mxu0 0.0
    %118 = vmatpush2.msra.mxu0 0.0
    %119 = vmatprep.subr.mxu0 0.0
    %120 = vmatpush2.msra.mxu0 0.0
    %121 = vmatprep.subr.mxu0 0.0
    %122 = vmatpush2.msra.mxu0 0.0
    %123 = vmatprep.mubr.f32.mxu0 0.0
    %124 = vmatmul.mubr.f32.gmra.mxu0 %v50
    %v125 = vpop.f32.mrf.mxu0
    %v126 = vadd.f32 %v46, %v125
    %v127 = vpop.f32.mrf.mxu0
    %128 = vmatprep.mubr.f32.mxu0 0.0
    %129 = vmatmul.mubr.f32.gmra.mxu0 %v53
    %v130 = vpop.f32.mrf.mxu0
    %v131 = vadd.f32 %v46, %v130
    %v132 = vpop.f32.mrf.mxu0
    %133 = vdwg.mxu0
    %v134 = vld [vmem:[#allocation2] sm:$0xff]
    %v135 = vld [vmem:[#allocation2 + $0x8] sm:$0xff]
    %v136 = vld [vmem:[#allocation2 + $0x10] sm:$0xff]
    %v137 = vld [vmem:[#allocation2 + $0x18] sm:$0xff]
    %v138 = vld [vmem:[#allocation2 + $0x20] sm:$0xff]
    %v139 = vld [vmem:[#allocation2 + $0x28] sm:$0xff]
    %v140 = vld [vmem:[#allocation2 + $0x30] sm:$0xff]
    %v141 = vld [vmem:[#allocation2 + $0x38] sm:$0xff]
    %v142 = vld [vmem:[#allocation2 + $0x40] sm:$0xff]
    %v143 = vld [vmem:[#allocation2 + $0x48] sm:$0xff]
    %v144 = vld [vmem:[#allocation2 + $0x50] sm:$0xff]
    %v145 = vld [vmem:[#allocation2 + $0x58] sm:$0xff]
    %v146 = vld [vmem:[#allocation2 + $0x60] sm:$0xff]
    %v147 = vld [vmem:[#allocation2 + $0x68] sm:$0xff]
    %v148 = vld [vmem:[#allocation2 + $0x70] sm:$0xff]
    %v149 = vld [vmem:[#allocation2 + $0x78] sm:$0xff]
    %v150 = vld [vmem:[%s5] sm:$0x1]
    %v152 = vlaneseq
    %v153 = vshrl.u32 %v152, 7
    %v154 = vsub.s32 0, %v153
    %v155 = vrot.slane %v150, %v154
    %157 = vmatprep.subr.mxu0 0.0
    %158 = vmatpush1.msra.mxu0 %v149
    %159 = vmatprep.subr.mxu0 0.0
    %160 = vmatpush1.msra.mxu0 %v148
    %161 = vmatprep.subr.mxu0 0.0
    %162 = vmatpush1.msra.mxu0 %v147
    %163 = vmatprep.subr.mxu0 0.0
    %164 = vmatpush1.msra.mxu0 %v146
    %165 = vmatprep.subr.mxu0 0.0
    %166 = vmatpush1.msra.mxu0 %v145
    %167 = vmatprep.subr.mxu0 0.0
    %168 = vmatpush1.msra.mxu0 %v144
    %169 = vmatprep.subr.mxu0 0.0
    %170 = vmatpush1.msra.mxu0 %v143
    %171 = vmatprep.subr.mxu0 0.0
    %172 = vmatpush1.msra.mxu0 %v142
    %173 = vmatprep.subr.mxu0 0.0
    %174 = vmatpush1.msra.mxu0 %v141
    %175 = vmatprep.subr.mxu0 0.0
    %176 = vmatpush1.msra.mxu0 %v140
    %177 = vmatprep.subr.mxu0 0.0
    %178 = vmatpush1.msra.mxu0 %v139
    %179 = vmatprep.subr.mxu0 0.0
    %180 = vmatpush1.msra.mxu0 %v138
    %181 = vmatprep.subr.mxu0 0.0
    %182 = vmatpush1.msra.mxu0 %v137
    %183 = vmatprep.subr.mxu0 0.0
    %184 = vmatpush1.msra.mxu0 %v136
    %185 = vmatprep.subr.mxu0 0.0
    %186 = vmatpush1.msra.mxu0 %v135
    %187 = vmatprep.subr.mxu0 0.0
    %188 = vmatpush1.msra.mxu0 %v134
    %189 = vmatprep.subr.mxu0 0.0
    %190 = vmatpush2.msra.mxu0 0.0
    %191 = vmatprep.subr.mxu0 0.0
    %192 = vmatpush2.msra.mxu0 0.0
    %193 = vmatprep.subr.mxu0 0.0
    %194 = vmatpush2.msra.mxu0 0.0
    %195 = vmatprep.subr.mxu0 0.0
    %196 = vmatpush2.msra.mxu0 0.0
    %197 = vmatprep.subr.mxu0 0.0
    %198 = vmatpush2.msra.mxu0 0.0
    %199 = vmatprep.subr.mxu0 0.0
    %200 = vmatpush2.msra.mxu0 0.0
    %201 = vmatprep.subr.mxu0 0.0
    %202 = vmatpush2.msra.mxu0 0.0
    %203 = vmatprep.subr.mxu0 0.0
    %204 = vmatpush2.msra.mxu0 0.0
    %205 = vmatprep.subr.mxu0 0.0
    %206 = vmatpush2.msra.mxu0 0.0
    %207 = vmatprep.subr.mxu0 0.0
    %208 = vmatpush2.msra.mxu0 0.0
    %209 = vmatprep.subr.mxu0 0.0
    %210 = vmatpush2.msra.mxu0 0.0
    %211 = vmatprep.subr.mxu0 0.0
    %212 = vmatpush2.msra.mxu0 0.0
    %213 = vmatprep.subr.mxu0 0.0
    %214 = vmatpush2.msra.mxu0 0.0
    %215 = vmatprep.subr.mxu0 0.0
    %216 = vmatpush2.msra.mxu0 0.0
    %217 = vmatprep.subr.mxu0 0.0
    %218 = vmatpush2.msra.mxu0 0.0
    %219 = vmatprep.subr.mxu0 0.0
    %220 = vmatpush2.msra.mxu0 0.0
    %221 = vmatprep.mubr.f32.mxu0 0.0
    %222 = vmatmul.mubr.f32.gmra.mxu0 %v126
    %v223 = vpop.f32.mrf.mxu0
    %v224 = vadd.f32 %v155, %v223
    %v225 = vpop.f32.mrf.mxu0
    %226 = vmatprep.mubr.f32.mxu0 0.0
    %227 = vmatmul.mubr.f32.gmra.mxu0 %v131
    %v228 = vpop.f32.mrf.mxu0
    %v229 = vadd.f32 %v155, %v228
    %v230 = vpop.f32.mrf.mxu0
    %231 = vdwg.mxu0
    %v232 = vld [vmem:[%s1] sm:$0xff]
    %v233 = vld [vmem:[%s1 + $0x8] sm:$0xff]
    %v234 = vadd.f32 %v224, %v232
    %v235 = vadd.f32 %v229, %v233
    %236 = vst [vmem:[#allocation5] sm:$0xff] %v234
    %237 = vst [vmem:[#allocation5 + $0x8] sm:$0xff] %v235
    // Predicated region
    $region30: #{tpu_custom_call.1} parent=1 // pred_check
      _
    $region31: #{tpu_custom_call.1} parent=1 // pred_check_branch
      %239 = sbr.rel (0) target = $region33
    $region32: #{tpu_custom_call.1} parent=1 // pred_region
      %s241 = ssub.s32 256, 256
      %242 = vsyncadd [#allocation4], %s241
      %s243 = sshll.u32 [#allocation5], 4
      %s244 = int_to_ptr.vmem [resolvable:$true] %s243
      %249 = dma.vmem_to_hbm [thread:$0]  %s244, 256, %s6, [#allocation4], 128, 128, 8
    $region33: #{tpu_custom_call.1} parent=1 // pred_fallthru
      _
    // Predicated region
    $region34: #{tpu_custom_call.1} parent=1 // pred_check
      _
    $region35: #{tpu_custom_call.1} parent=1 // pred_check_branch
      %251 = sbr.rel (0) target = $region37
    $region36: #{tpu_custom_call.1} parent=1 // pred_region
      %252 = dma.done [#allocation4], 256
    $region37: #{tpu_custom_call.1} parent=1 // pred_fallthru
      _
    %253 = vsyncpa [#allocation3], 1
    %254 = vsyncpa [#allocation4], 1

</llo_original>
